<compile_context>
chip_gen: v7x
topology: tpu7x:2x2x1
jax: 0.10.0
libtpu: 0.0.40
codegen_flags: <defaults>
</compile_context>

<pallas_src>
import jax
import jax.numpy as jnp
from jax.experimental import pallas as pl
from jax.experimental.pallas import tpu as pltpu


def _self_attn_kernel(x_ref, w_ref, b_ref, o_ref):
    # x_ref: (1, C, N) f32 | w_ref: (2C, C) f32 | b_ref: (2C, 1) f32
    x_cn = x_ref[0]                                   # (C, N) f32, channel-major
    C = x_cn.shape[0]

    # Fused projection (channel-major):
    #   p[:C]  = M^T @ x + u          -> xm_cn  (query-side, softmax-folded)
    #   p[C:]  = gamma * (Wv^T @ x+b) -> v_cn   (value, gamma pre-folded)
    p = jnp.dot(w_ref[...], x_cn, preferred_element_type=jnp.float32)
    p = p + b_ref[...]                                # (2C, N); row-bias broadcast
    xm_cn = p[:C]                                     # (C, N)  sublane-aligned slice
    v_cn = p[C:]                                      # (C, N)

    # Transposed energy: energy_t[j, i] = k_j . q_i  (== energy[i, j]).
    # One small (C,N) XLU transpose; both big matmuls stay native NN form.
    x_nc = x_cn.T                                     # (N, C)
    energy_t = jnp.dot(x_nc, xm_cn,
                       preferred_element_type=jnp.float32)   # (N, N)

    # Column-softmax statistics are naturally lane-oriented (1, N).
    m = jnp.max(energy_t, axis=0, keepdims=True)      # (1, N)
    e_t = jnp.exp(energy_t - m)                       # (N, N) unnormalized
    l = jnp.sum(e_t, axis=0, keepdims=True)           # (1, N)

    # PV with the unnormalized weights (native NN matmul, lane-dense output),
    # then deferred normalization on only C*N elements.
    out_un = jnp.dot(v_cn, e_t,
                     preferred_element_type=jnp.float32)     # (C, N)
    o_ref[0] = out_un * (1.0 / l) + x_cn              # residual stays channel-major


def self_attention_pallas(x_nchw, params):
    """x_nchw: (B, C, H, W) float32.  Returns (B, C, H, W) float32."""
    B, C, H, W = x_nchw.shape
    N = H * W
    eps = 1e-5

    x_cn = x_nchw.reshape(B, C, N)            # free reshape, no HBM transpose

    def fold(conv_w, conv_b, bn_g, bn_b, bn_mean, bn_var):
        # conv_w: (out, in, 1, 1) -> (in, out); fold conv bias + eval-mode BN.
        w = jnp.transpose(conv_w[:, :, 0, 0], (1, 0))
        scale = bn_g / jnp.sqrt(bn_var + eps)
        shift = (conv_b - bn_mean) * scale + bn_b
        return w * scale[None, :], shift

    wq, bq = fold(params["q_w"], params["q_b"], params["qn_g"],
                  params["qn_b"], params["qn_m"], params["qn_v"])   # (C,Cq),(Cq,)
    wk, _bk = fold(params["k_w"], params["k_b"], params["kn_g"],
                   params["kn_b"], params["kn_m"], params["kn_v"])  # (C,Cq),(Cq,)
    wv, bv = fold(params["v_w"], params["v_b"], params["vn_g"],
                  params["vn_b"], params["vn_m"], params["vn_v"])   # (C,C),(C,)
    gamma = params["gamma"].reshape(()).astype(jnp.float32)

    # softmax(q k^T) == softmax((x M + u) x^T): key bias bk and row-constant
    # terms vanish under the row softmax.
    M = wq @ wk.T                              # (C, C)
    u = wk @ bq                                # (C,)

    # Channel-major packing:  p = W_all @ x_cn + b_all
    #   rows [0:C)  -> M^T (query-side),   rows [C:2C) -> gamma * Wv^T (value)
    w_all = jnp.concatenate([M.T, gamma * wv.T], axis=0).astype(jnp.float32)  # (2C, C)
    b_all = jnp.concatenate([u, gamma * bv])[:, None].astype(jnp.float32)     # (2C, 1)

    out_cn = pl.pallas_call(
        _self_attn_kernel,
        out_shape=jax.ShapeDtypeStruct((B, C, N), jnp.float32),
        grid_spec=pltpu.PrefetchScalarGridSpec(
            num_scalar_prefetch=0,
            grid=(B,),
            in_specs=[
                pl.BlockSpec((1, C, N), lambda b: (b, 0, 0)),   # x (channel-major)
                pl.BlockSpec((2 * C, C), lambda b: (0, 0)),     # [M^T ; gamma*Wv^T]
                pl.BlockSpec((2 * C, 1), lambda b: (0, 0)),     # [u ; gamma*bv]
            ],
            out_specs=pl.BlockSpec((1, C, N), lambda b: (b, 0, 0)),
        ),
        compiler_params=pltpu.CompilerParams(
            dimension_semantics=("parallel",)),
    )(x_cn, w_all, b_all)

    return out_cn.reshape(B, C, H, W)          # free reshape back to NCHW


def self_attention_ref(x, params):
    """Pure-JAX reference mirroring the PyTorch forward (eval-mode BN)."""
    B, C, H, W = x.shape
    N = H * W
    eps = 1e-5

    def conv1x1(inp, w, b):
        return jnp.einsum("bchw,oc->bohw", inp, w[:, :, 0, 0]) + b[None, :, None, None]

    def bn(inp, g, bta, m, v):
        return (inp - m[None, :, None, None]) / jnp.sqrt(v[None, :, None, None] + eps) \
               * g[None, :, None, None] + bta[None, :, None, None]

    q = bn(conv1x1(x, params["q_w"], params["q_b"]),
           params["qn_g"], params["qn_b"], params["qn_m"], params["qn_v"])
    k = bn(conv1x1(x, params["k_w"], params["k_b"]),
           params["kn_g"], params["kn_b"], params["kn_m"], params["kn_v"])
    v = bn(conv1x1(x, params["v_w"], params["v_b"]),
           params["vn_g"], params["vn_b"], params["vn_m"], params["vn_v"])

    proj_q = jnp.transpose(q.reshape(B, -1, N), (0, 2, 1))     # (B, N, Cq)
    proj_k = k.reshape(B, -1, N)                               # (B, Cq, N)
    energy = jnp.einsum("bnc,bcm->bnm", proj_q, proj_k)        # (B, N, N)
    att = jax.nn.softmax(energy, axis=-1)
    proj_v = v.reshape(B, -1, N)                               # (B, C, N)
    out = jnp.einsum("bcn,bmn->bcm", proj_v, att)              # (B, C, N)
    out = out.reshape(B, C, H, W)
    return params["gamma"].reshape(()) * out + x


def make_params(key, C):
    Cq = C // 8
    ks = jax.random.split(key, 16)
    f = jnp.float32
    return {
        "q_w": 0.1 * jax.random.normal(ks[0], (Cq, C, 1, 1), f),
        "q_b": 0.1 * jax.random.normal(ks[1], (Cq,), f),
        "k_w": 0.1 * jax.random.normal(ks[2], (Cq, C, 1, 1), f),
        "k_b": 0.1 * jax.random.normal(ks[3], (Cq,), f),
        "v_w": 0.1 * jax.random.normal(ks[4], (C, C, 1, 1), f),
        "v_b": 0.1 * jax.random.normal(ks[5], (C,), f),
        # BatchNorm affine params + running stats (eval mode)
        "qn_g": 1.0 + 0.1 * jax.random.normal(ks[6], (Cq,), f),
        "qn_b": 0.1 * jax.random.normal(ks[7], (Cq,), f),
        "qn_m": 0.05 * jax.random.normal(ks[8], (Cq,), f),
        "qn_v": 1.0 + 0.1 * jax.random.uniform(ks[9], (Cq,), f),
        "kn_g": 1.0 + 0.1 * jax.random.normal(ks[10], (Cq,), f),
        "kn_b": 0.1 * jax.random.normal(ks[11], (Cq,), f),
        "kn_m": 0.05 * jax.random.normal(ks[12], (Cq,), f),
        "kn_v": 1.0 + 0.1 * jax.random.uniform(ks[13], (Cq,), f),
        "vn_g": jnp.ones((C,), f),
        "vn_b": jnp.zeros((C,), f),
        "vn_m": jnp.zeros((C,), f),
        "vn_v": jnp.ones((C,), f),
        # module __init__ sets gamma = 0; use a nonzero deterministic value so
        # the attention path actually contributes to the output under test.
        "gamma": jnp.array([0.5], f),
    }


if __name__ == "__main__":
    # in_channels=32 -> query/key channels = 4; H*W = 256 (lane-dense blocks)
    B, C, H, W = 2, 32, 16, 16
    key = jax.random.PRNGKey(0)
    kx, kp = jax.random.split(key)
    x = jax.random.normal(kx, (B, C, H, W), jnp.float32)
    params = make_params(kp, C)

    out = jax.jit(self_attention_pallas)(x, params)
    out = jax.block_until_ready(out)

    ref = self_attention_ref(x, params)
    assert out.shape == (B, C, H, W)
    max_err = float(jnp.max(jnp.abs(out - ref)))
    assert jnp.allclose(out, ref, atol=2e-3, rtol=2e-3), max_err
    print("KERNEL_OK")
</pallas_src>

<mosaic_0001>
module attributes {stable_mosaic.version = 11 : i64} {
  func.func @_self_attn_kernel(%arg0: i32, %arg1: memref<1x32x256xf32, #tpu.memory_space<vmem>>, %arg2: memref<64x32xf32, #tpu.memory_space<vmem>>, %arg3: memref<64x1xf32, #tpu.memory_space<vmem>>, %arg4: memref<1x32x256xf32, #tpu.memory_space<vmem>>) attributes {dimension_semantics = [#tpu.dimension_semantics<parallel>], iteration_bounds = array<i64: 2>, scalar_prefetch = 0 : i64, scratch_operands = 0 : i64, tpu.core_type = #tpu.core_type<tc>, window_params = [{transform_indices = @transform_0, window_bounds = array<i64: 1, 32, 256>}, {pipeline_mode = #tpu.pipeline_mode<synchronous>, transform_indices = @transform_1, window_bounds = array<i64: 64, 32>}, {pipeline_mode = #tpu.pipeline_mode<synchronous>, transform_indices = @transform_2, window_bounds = array<i64: 64, 1>}, {transform_indices = @transform_3, window_bounds = array<i64: 1, 32, 256>}]} {
    %c0 = arith.constant 0 : index
    %c0_0 = arith.constant 0 : index
    %c0_1 = arith.constant 0 : index
    %0 = vector.load %arg1[%c0, %c0_0, %c0_1] : memref<1x32x256xf32, #tpu.memory_space<vmem>>, vector<1x32x256xf32>
    %1 = vector.shape_cast %0 : vector<1x32x256xf32> to vector<32x256xf32>
    %c0_2 = arith.constant 0 : index
    %c0_3 = arith.constant 0 : index
    %2 = vector.load %arg2[%c0_2, %c0_3] : memref<64x32xf32, #tpu.memory_space<vmem>>, vector<64x32xf32>
    %cst = arith.constant dense<0.000000e+00> : vector<64x256xf32>
    %3 = tpu.matmul %2, %1, %cst {dimension_numbers = #tpu.dot_dimension_numbers<[1], [0], [0], [1], [0, 0, 1, 1], [], []>} : vector<64x32xf32>, vector<32x256xf32>, vector<64x256xf32> -> vector<64x256xf32>
    %c0_4 = arith.constant 0 : index
    %c0_5 = arith.constant 0 : index
    %4 = vector.load %arg3[%c0_4, %c0_5] : memref<64x1xf32, #tpu.memory_space<vmem>>, vector<64x1xf32>
    %5 = vector.broadcast %4 : vector<64x1xf32> to vector<64x256xf32>
    %6 = arith.addf %3, %5 : vector<64x256xf32>
    %7 = vector.extract_strided_slice %6 {offsets = [0, 0], sizes = [32, 256], strides = [1, 1]} : vector<64x256xf32> to vector<32x256xf32>
    %8 = vector.extract_strided_slice %6 {offsets = [32, 0], sizes = [32, 256], strides = [1, 1]} : vector<64x256xf32> to vector<32x256xf32>
    %9 = tpu.transpose %1, [1, 0] : vector<32x256xf32> -> vector<256x32xf32>
    %cst_6 = arith.constant dense<0.000000e+00> : vector<256x256xf32>
    %10 = tpu.matmul %9, %7, %cst_6 {dimension_numbers = #tpu.dot_dimension_numbers<[1], [0], [0], [1], [0, 0, 1, 1], [], []>} : vector<256x32xf32>, vector<32x256xf32>, vector<256x256xf32> -> vector<256x256xf32>
    %cst_7 = arith.constant dense<0xFF800000> : vector<256xf32>
    %11 = vector.multi_reduction <maximumf>, %10, %cst_7 [0] : vector<256x256xf32> to vector<256xf32>
    %12 = vector.shape_cast %11 : vector<256xf32> to vector<1x256xf32>
    %13 = vector.broadcast %12 : vector<1x256xf32> to vector<256x256xf32>
    %14 = arith.subf %10, %13 : vector<256x256xf32>
    %15 = math.exp %14 : vector<256x256xf32>
    %cst_8 = arith.constant dense<0.000000e+00> : vector<256xf32>
    %16 = vector.multi_reduction <add>, %15, %cst_8 [0] : vector<256x256xf32> to vector<256xf32>
    %17 = vector.shape_cast %16 : vector<256xf32> to vector<1x256xf32>
    %cst_9 = arith.constant dense<0.000000e+00> : vector<32x256xf32>
    %18 = tpu.matmul %8, %15, %cst_9 {dimension_numbers = #tpu.dot_dimension_numbers<[1], [0], [0], [1], [0, 0, 1, 1], [], []>} : vector<32x256xf32>, vector<256x256xf32>, vector<32x256xf32> -> vector<32x256xf32>
    %cst_10 = arith.constant 1.000000e+00 : f32
    %19 = vector.broadcast %cst_10 : f32 to vector<1x256xf32>
    %20 = arith.divf %19, %17 : vector<1x256xf32>
    %21 = vector.broadcast %20 : vector<1x256xf32> to vector<32x256xf32>
    %22 = arith.mulf %18, %21 : vector<32x256xf32>
    %23 = arith.addf %22, %1 : vector<32x256xf32>
    %c0_11 = arith.constant 0 : index
    %c0_12 = arith.constant 0 : index
    %c0_13 = arith.constant 0 : index
    %24 = vector.load %arg4[%c0_11, %c0_12, %c0_13] : memref<1x32x256xf32, #tpu.memory_space<vmem>>, vector<1x32x256xf32>
    %25 = vector.shape_cast %24 : vector<1x32x256xf32> to vector<32x256xf32>
    %26 = vector.shape_cast %23 : vector<32x256xf32> to vector<1x32x256xf32>
    tpu.vector_store %arg4[%c0_11, %c0_12, %c0_13], %26 {strides = array<i32>} : memref<1x32x256xf32, #tpu.memory_space<vmem>>, vector<1x32x256xf32>,
    return
  }
  func.func @transform_0(%arg0: i32) -> (i32, i32, i32) {
    %c0_i32 = arith.constant 0 : i32
    %c0_i32_0 = arith.constant 0 : i32
    %c0_i32_1 = arith.constant 0 : i32
    return %arg0, %c0_i32, %c0_i32_0 : i32, i32, i32
  }
  func.func @transform_1(%arg0: i32) -> (i32, i32) {
    %c0_i32 = arith.constant 0 : i32
    %c0_i32_0 = arith.constant 0 : i32
    %c0_i32_1 = arith.constant 0 : i32
    return %c0_i32, %c0_i32_0 : i32, i32
  }
  func.func @transform_2(%arg0: i32) -> (i32, i32) {
    %c0_i32 = arith.constant 0 : i32
    %c0_i32_0 = arith.constant 0 : i32
    %c0_i32_1 = arith.constant 0 : i32
    return %c0_i32, %c0_i32_0 : i32, i32
  }
  func.func @transform_3(%arg0: i32) -> (i32, i32, i32) {
    %c0_i32 = arith.constant 0 : i32
    %c0_i32_0 = arith.constant 0 : i32
    %c0_i32_1 = arith.constant 0 : i32
    return %arg0, %c0_i32, %c0_i32_0 : i32, i32, i32
  }
}

</mosaic_0001>

<llo_original>
// kernel: self_attention_pallas.1
$region0: #{self_attention_pallas.1}
  #allocation0 [shape = 'u32[]', space=smem, size = 0x4, offset = 0x4, fixed_abs, tag = 'smem constant byte address 0x4 - core index']
  #allocation1 [shape = 'u32[144,128]{1,0:T(1,128)}', space=vmem, size = 0x12000, scoped, tag = 'internal scratch']
  %s0 = inlined_call_operand.vmem [shape: f32[2,32,256], index: 0, kind: input, shape index: {}]
  %s1 = inlined_call_operand.vmem [shape: f32[64,32], index: 1, kind: input, shape index: {}]
  %s2 = inlined_call_operand.vmem [shape: f32[64,1], index: 2, kind: input, shape index: {}]
  %s3 = inlined_call_operand.vmem [shape: f32[2,32,256], index: 3, kind: output, shape index: {}]
  %s4 = sld [smem:[#allocation0]]
  $region45: #{self_attention_pallas.1} parent=0
    _
  %s6 = ssub.s32 1, %s4
  %s7 = scalar_select 0, %s6, %s4
  loop: start=0, step=1, limit=4
  $region2: #{self_attention_pallas.1} parent=0 // loop_pre_header
    _
  $region3: #{self_attention_pallas.1} parent=0 // loop_header
    %s9 = sphi 0, %s13
    %p10 = scmp.ge.s32.totalorder %s9, 4
    %s19 = sphi 0, %s21
    %s22 = sphi 0, %s19
    %s23 = sphi 0, %s22
    %s39 = sphi 0, %s23
    %s43 = sphi 0, %s43
    %s45 = sphi 0, %s43
    %s46 = sphi 0, %s45
    %s60 = sphi 0, %s46
    %s64 = sphi 0, %s64
    %s66 = sphi 0, %s64
    %s67 = sphi 0, %s66
    %s81 = sphi 0, %s67
    %s87 = sphi 0, %s89
    %s90 = sphi 0, %s87
    %s91 = sphi 0, %s90
    %s107 = sphi 0, %s91
  $region4: #{self_attention_pallas.1} parent=0 // loop_header_branch
    %12 = sbr.rel (%p10) target = $region8
  $region5: #{self_attention_pallas.1} parent=0 // loop_body
    %s14 = ssub.s32 %s9, 1
    %s15 = ssub.s32 %s9, 2
    %s16 = sadd.s32 %s9, 1
    %s17 = ssub.s32 %s9, %s16
    %p18 = scmp.eq.s32.totalorder %s17, 0
    %s20 = sadd.s32 %s19, 1
    %s21 = scalar_select %p18, %s19, %s20
    %p24 = pneg %p18
    %p25 = scmp.eq.s32.totalorder %s9, 1
    %p26 = por %p24, %p25
    %p27 = scmp.ne.s32.totalorder %s19, %s22
    %p28 = scmp.eq.s32.totalorder %s9, 0
    %p29 = por %p27, %p28
    %p30 = scmp.ne.s32.totalorder %s19, %s22
    %p31 = scmp.eq.s32.totalorder %s14, 1
    %p32 = por %p30, %p31
    %p33 = scmp.ne.s32.totalorder %s22, %s23
    %p34 = scmp.eq.s32.totalorder %s14, 0
    %p35 = por %p33, %p34
    %p36 = scmp.ne.s32.totalorder %s22, %s23
    %p37 = scmp.eq.s32.totalorder %s15, 1
    %p38 = por %p36, %p37
    %p40 = scmp.ne.s32.totalorder %s23, %s39
    %p41 = scmp.eq.s32.totalorder %s15, 0
    %p42 = por %p40, %p41
    %s44 = sadd.s32 %s43, 1
    %p47 = scmp.eq.s32.totalorder %s9, 1
    %p48 = scmp.ne.s32.totalorder %s43, %s45
    %p49 = scmp.eq.s32.totalorder %s9, 0
    %p50 = por %p48, %p49
    %p51 = scmp.ne.s32.totalorder %s43, %s45
    %p52 = scmp.eq.s32.totalorder %s14, 1
    %p53 = por %p51, %p52
    %p54 = scmp.ne.s32.totalorder %s45, %s46
    %p55 = scmp.eq.s32.totalorder %s14, 0
    %p56 = por %p54, %p55
    %p57 = scmp.ne.s32.totalorder %s45, %s46
    %p58 = scmp.eq.s32.totalorder %s15, 1
    %p59 = por %p57, %p58
    %p61 = scmp.ne.s32.totalorder %s46, %s60
    %p62 = scmp.eq.s32.totalorder %s15, 0
    %p63 = por %p61, %p62
    %s65 = sadd.s32 %s64, 1
    %p68 = scmp.eq.s32.totalorder %s9, 1
    %p69 = scmp.ne.s32.totalorder %s64, %s66
    %p70 = scmp.eq.s32.totalorder %s9, 0
    %p71 = por %p69, %p70
    %p72 = scmp.ne.s32.totalorder %s64, %s66
    %p73 = scmp.eq.s32.totalorder %s14, 1
    %p74 = por %p72, %p73
    %p75 = scmp.ne.s32.totalorder %s66, %s67
    %p76 = scmp.eq.s32.totalorder %s14, 0
    %p77 = por %p75, %p76
    %p78 = scmp.ne.s32.totalorder %s66, %s67
    %p79 = scmp.eq.s32.totalorder %s15, 1
    %p80 = por %p78, %p79
    %p82 = scmp.ne.s32.totalorder %s67, %s81
    %p83 = scmp.eq.s32.totalorder %s15, 0
    %p84 = por %p82, %p83
    %s85 = ssub.s32 %s9, %s16
    %p86 = scmp.eq.s32.totalorder %s85, 0
    %s88 = sadd.s32 %s87, 1
    %s89 = scalar_select %p86, %s87, %s88
    %p92 = pneg %p86
    %p93 = scmp.eq.s32.totalorder %s9, 1
    %p94 = por %p92, %p93
    %p95 = scmp.ne.s32.totalorder %s87, %s90
    %p96 = scmp.eq.s32.totalorder %s9, 0
    %p97 = por %p95, %p96
    %p98 = scmp.ne.s32.totalorder %s87, %s90
    %p99 = scmp.eq.s32.totalorder %s14, 1
    %p100 = por %p98, %p99
    %p101 = scmp.ne.s32.totalorder %s90, %s91
    %p102 = scmp.eq.s32.totalorder %s14, 0
    %p103 = por %p101, %p102
    %p104 = scmp.ne.s32.totalorder %s90, %s91
    %p105 = scmp.eq.s32.totalorder %s15, 1
    %p106 = por %p104, %p105
    %p108 = scmp.ne.s32.totalorder %s91, %s107
    %p109 = scmp.eq.s32.totalorder %s15, 0
    %p110 = por %p108, %p109
    %p111 = scmp.le.s32.totalorder 1, %s9
    %p112 = scmp.lt.s32.totalorder %s9, 3
    %p113 = pnand %p111, %p112
    %p114 = pneg %p113
    // Predicated region
    $region9: #{self_attention_pallas.1} parent=5 // pred_check
      _
    $region10: #{self_attention_pallas.1} parent=5 // pred_check_branch
      %116 = sbr.rel (%p113) target = $region12
    $region11: #{self_attention_pallas.1} parent=5 // pred_region
      %s117 = ssub.s32 %s9, 1
      // Predicated region
      $region13: #{self_attention_pallas.1} parent=11 // pred_check
        %p118 = pneg %p56
      $region14: #{self_attention_pallas.1} parent=11 // pred_check_branch
        %120 = sbr.rel (%p118) target = $region16
      $region15: #{self_attention_pallas.1} parent=11 // pred_region
        _
      $region16: #{self_attention_pallas.1} parent=11 // pred_fallthru
        _
      // Predicated region
      $region17: #{self_attention_pallas.1} parent=11 // pred_check
        %p121 = pneg %p77
      $region18: #{self_attention_pallas.1} parent=11 // pred_check_branch
        %123 = sbr.rel (%p121) target = $region20
      $region19: #{self_attention_pallas.1} parent=11 // pred_region
        _
      $region20: #{self_attention_pallas.1} parent=11 // pred_fallthru
        _
    $region12: #{self_attention_pallas.1} parent=5 // pred_fallthru
      _
    %p124 = scmp.lt.s32.totalorder %s9, 2
    // Predicated region
    $region21: #{self_attention_pallas.1} parent=5 // pred_check
      %p125 = pneg %p124
    $region22: #{self_attention_pallas.1} parent=5 // pred_check_branch
      %127 = sbr.rel (%p125) target = $region24
    $region23: #{self_attention_pallas.1} parent=5 // pred_region
      // Predicated region
      $region25: #{self_attention_pallas.1} parent=23 // pred_check
        %p128 = pneg %p29
      $region26: #{self_attention_pallas.1} parent=23 // pred_check_branch
        %130 = sbr.rel (%p128) target = $region28
      $region27: #{self_attention_pallas.1} parent=23 // pred_region
        %p131 = scmp.lt.s32.totalorder %s9, 1
        %s132 = scalar_select %p131, %s9, 1
        %s133 = smul.addr %s132, 8
        %s134 = smul.addr %s133, 8
        %s135 = scalar_lea.vmem %s0, %s134
      $region28: #{self_attention_pallas.1} parent=23 // pred_fallthru
        _
    $region24: #{self_attention_pallas.1} parent=5 // pred_fallthru
      _
    %p136 = scmp.le.s32.totalorder 1, %s9
    %p137 = scmp.lt.s32.totalorder %s9, 3
    %p138 = pnand %p136, %p137
    %p139 = pneg %p138
    // Predicated region
    $region29: #{self_attention_pallas.1} parent=5 // pred_check
      _
    $region30: #{self_attention_pallas.1} parent=5 // pred_check_branch
      %141 = sbr.rel (%p138) target = $region32
    $region31: #{self_attention_pallas.1} parent=5 // pred_region
      %s142 = ssub.s32 %s9, 1
      %p143 = scmp.lt.s32.totalorder %s14, 1
      %s144 = scalar_select %p143, %s14, 1
      %s145 = smul.addr %s144, 8
      %s146 = smul.addr %s145, 8
      %s147 = scalar_lea.vmem %s0, %s146
      %p148 = pneg %p35
      %p149 = pneg %p32
      %p150 = pneg %p56
      %p151 = pneg %p53
      %p152 = pneg %p77
      %p153 = pneg %p74
      %p154 = pneg %p103
      %p155 = pneg %p100
      %p156 = scmp.lt.s32.totalorder %s14, 1
      %s157 = scalar_select %p156, %s14, 1
      %s158 = smul.addr %s157, 8
      %s159 = smul.addr %s158, 8
      %s160 = scalar_lea.vmem %s3, %s159
      %p161 = scmp.lt.s32.totalorder %s14, 1
      %s162 = scalar_select %p161, %s14, 1
      %s163 = smul.addr %s162, 8
      %s164 = smul.addr %s163, 8
      %s165 = scalar_lea.vmem %s0, %s164
      %p166 = scmp.lt.s32.totalorder %s14, 1
      %s167 = scalar_select %p166, %s14, 1
      %s168 = smul.addr %s167, 8
      %s169 = smul.addr %s168, 8
      %s170 = scalar_lea.vmem %s3, %s169
      %v171 = vld [vmem:[%s165] sm:$0xff]
      %v172 = vld [vmem:[%s165 + $0x8] sm:$0xff]
      %v173 = vld [vmem:[%s165 + $0x10] sm:$0xff]
      %v174 = vld [vmem:[%s165 + $0x18] sm:$0xff]
      %v175 = vld [vmem:[%s165 + $0x20] sm:$0xff]
      %v176 = vld [vmem:[%s165 + $0x28] sm:$0xff]
      %v177 = vld [vmem:[%s165 + $0x30] sm:$0xff]
      %v178 = vld [vmem:[%s165 + $0x38] sm:$0xff]
      %v179 = vld [vmem:[%s1] sm:$0xff]
      %v180 = vld [vmem:[%s1 + $0x8] sm:$0xff]
      %v181 = vld [vmem:[%s1 + $0x10] sm:$0xff]
      %v182 = vld [vmem:[%s1 + $0x18] sm:$0xff]
      %v183 = vld [vmem:[%s1 + $0x20] sm:$0xff]
      %v184 = vld [vmem:[%s1 + $0x28] sm:$0xff]
      %v185 = vld [vmem:[%s1 + $0x30] sm:$0xff]
      %v186 = vld [vmem:[%s1 + $0x38] sm:$0xff]
      %v187 = vld [vmem:[%s2] sm:$0xff]
      %v188 = vld [vmem:[%s2 + $0x8] sm:$0xff]
      %v189 = vld [vmem:[%s2 + $0x10] sm:$0xff]
      %v190 = vld [vmem:[%s2 + $0x18] sm:$0xff]
      %v191 = vld [vmem:[%s2 + $0x20] sm:$0xff]
      %v192 = vld [vmem:[%s2 + $0x28] sm:$0xff]
      %v193 = vld [vmem:[%s2 + $0x30] sm:$0xff]
      %v194 = vld [vmem:[%s2 + $0x38] sm:$0xff]
      %196 = vset.pattern.permute.xlu0 0
      %197 = vperm.xlu0 %196, %v187
      %v198 = vpop.permute.xlu0 %197
      %201 = vset.pattern.permute.xlu0 0
      %202 = vperm.xlu0 %201, %v188
      %v203 = vpop.permute.xlu0 %202
      %206 = vset.pattern.permute.xlu0 0
      %207 = vperm.xlu0 %206, %v189
      %v208 = vpop.permute.xlu0 %207
      %211 = vset.pattern.permute.xlu0 0
      %212 = vperm.xlu0 %211, %v190
      %v213 = vpop.permute.xlu0 %212
      %216 = vset.pattern.permute.xlu0 0
      %217 = vperm.xlu0 %216, %v191
      %v218 = vpop.permute.xlu0 %217
      %221 = vset.pattern.permute.xlu0 0
      %222 = vperm.xlu0 %221, %v192
      %v223 = vpop.permute.xlu0 %222
      %226 = vset.pattern.permute.xlu0 0
      %227 = vperm.xlu0 %226, %v193
      %v228 = vpop.permute.xlu0 %227
      %231 = vset.pattern.permute.xlu0 0
      %232 = vperm.xlu0 %231, %v194
      %v233 = vpop.permute.xlu0 %232
      %vm235 = vcmask 261120
      %v237 = vsel %vm235, %v179, 0
      %v240 = vsel %vm235, %v180, 0
      %v243 = vsel %vm235, %v181, 0
      %v246 = vsel %vm235, %v182, 0
      %v249 = vsel %vm235, %v183, 0
      %v252 = vsel %vm235, %v184, 0
      %v255 = vsel %vm235, %v185, 0
      %v258 = vsel %vm235, %v186, 0
      %260 = vmatprep.subr.mxu0 %v172
      %261 = vmatpush1.msra.mxu0 %v171
      %262 = vmatprep.subr.mxu0 %v174
      %263 = vmatpush1.msra.mxu0 %v173
      %264 = vmatprep.subr.mxu0 %v176
      %265 = vmatpush1.msra.mxu0 %v175
      %266 = vmatprep.subr.mxu0 %v178
      %267 = vmatpush1.msra.mxu0 %v177
      %268 = vmatprep.subr.mxu0 0.0
      %269 = vmatpush1.msra.mxu0 0.0
      %270 = vmatprep.subr.mxu0 0.0
      %271 = vmatpush1.msra.mxu0 0.0
      %272 = vmatprep.subr.mxu0 0.0
      %273 = vmatpush1.msra.mxu0 0.0
      %274 = vmatprep.subr.mxu0 0.0
      %275 = vmatpush1.msra.mxu0 0.0
      %276 = vmatprep.subr.mxu0 0.0
      %277 = vmatpush1.msra.mxu0 0.0
      %278 = vmatprep.subr.mxu0 0.0
      %279 = vmatpush1.msra.mxu0 0.0
      %280 = vmatprep.subr.mxu0 0.0
      %281 = vmatpush1.msra.mxu0 0.0
      %282 = vmatprep.subr.mxu0 0.0
      %283 = vmatpush1.msra.mxu0 0.0
      %284 = vmatprep.subr.mxu0 0.0
      %285 = vmatpush1.msra.mxu0 0.0
      %286 = vmatprep.subr.mxu0 0.0
      %287 = vmatpush1.msra.mxu0 0.0
      %288 = vmatprep.subr.mxu0 0.0
      %289 = vmatpush1.msra.mxu0 0.0
      %290 = vmatprep.subr.mxu0 0.0
      %291 = vmatpush1.msra.mxu0 0.0
      %292 = vmatprep.subr.mxu0 0.0
      %293 = vmatpush1.msra.mxu0 0.0
      %294 = vmatprep.subr.mxu0 0.0
      %295 = vmatpush1.msra.mxu0 0.0
      %296 = vmatprep.subr.mxu0 0.0
      %297 = vmatpush1.msra.mxu0 0.0
      %298 = vmatprep.subr.mxu0 0.0
      %299 = vmatpush1.msra.mxu0 0.0
      %300 = vmatprep.subr.mxu0 0.0
      %301 = vmatpush1.msra.mxu0 0.0
      %302 = vmatprep.subr.mxu0 0.0
      %303 = vmatpush1.msra.mxu0 0.0
      %304 = vmatprep.subr.mxu0 0.0
      %305 = vmatpush1.msra.mxu0 0.0
      %306 = vmatprep.subr.mxu0 0.0
      %307 = vmatpush1.msra.mxu0 0.0
      %308 = vmatprep.subr.mxu0 0.0
      %309 = vmatpush1.msra.mxu0 0.0
      %310 = vmatprep.subr.mxu0 0.0
      %311 = vmatpush1.msra.mxu0 0.0
      %312 = vmatprep.subr.mxu0 0.0
      %313 = vmatpush1.msra.mxu0 0.0
      %314 = vmatprep.subr.mxu0 0.0
      %315 = vmatpush1.msra.mxu0 0.0
      %316 = vmatprep.subr.mxu0 0.0
      %317 = vmatpush1.msra.mxu0 0.0
      %318 = vmatprep.subr.mxu0 0.0
      %319 = vmatpush1.msra.mxu0 0.0
      %320 = vmatprep.subr.mxu0 0.0
      %321 = vmatpush1.msra.mxu0 0.0
      %322 = vmatprep.subr.mxu0 0.0
      %323 = vmatpush1.msra.mxu0 0.0
      %324 = vmatprep.mubr.f32.mxu0 0.0
      %325 = vmatmul.mubr.f32.gmra.mrb[0].mxu0 %v237
      %v326 = vpop.f32.mrb[0].mxu0
      %v327 = vadd.f32 %v198, %v326
      %v328 = vpop.f32.mrb[0].mxu0
      %v329 = vadd.f32 %v198, %v328
      %330 = vmatprep.mubr.f32.mxu0 0.0
      %331 = vmatmul.mubr.f32.gmra.mrb[0].mxu0 %v240
      %v332 = vpop.f32.mrb[0].mxu0
      %v333 = vadd.f32 %v203, %v332
      %v334 = vpop.f32.mrb[0].mxu0
      %v335 = vadd.f32 %v203, %v334
      %336 = vmatprep.mubr.f32.mxu0 0.0
      %337 = vmatmul.mubr.f32.gmra.mrb[0].mxu0 %v243
      %v338 = vpop.f32.mrb[0].mxu0
      %v339 = vadd.f32 %v208, %v338
      %v340 = vpop.f32.mrb[0].mxu0
      %v341 = vadd.f32 %v208, %v340
      %342 = vmatprep.mubr.f32.mxu0 0.0
      %343 = vmatmul.mubr.f32.gmra.mrb[0].mxu0 %v246
      %v344 = vpop.f32.mrb[0].mxu0
      %v345 = vadd.f32 %v213, %v344
      %v346 = vpop.f32.mrb[0].mxu0
      %v347 = vadd.f32 %v213, %v346
      %348 = vmatprep.mubr.f32.mxu0 0.0
      %349 = vmatmul.mubr.f32.gmra.mrb[0].mxu0 %v249
      %v350 = vpop.f32.mrb[0].mxu0
      %v351 = vadd.f32 %v218, %v350
      %v352 = vpop.f32.mrb[0].mxu0
      %v353 = vadd.f32 %v218, %v352
      %354 = vmatprep.mubr.f32.mxu0 0.0
      %355 = vmatmul.mubr.f32.gmra.mrb[0].mxu0 %v252
      %v356 = vpop.f32.mrb[0].mxu0
      %v357 = vadd.f32 %v223, %v356
      %v358 = vpop.f32.mrb[0].mxu0
      %v359 = vadd.f32 %v223, %v358
      %360 = vmatprep.mubr.f32.mxu0 0.0
      %361 = vmatmul.mubr.f32.gmra.mrb[0].mxu0 %v255
      %v362 = vpop.f32.mrb[0].mxu0
      %v363 = vadd.f32 %v228, %v362
      %v364 = vpop.f32.mrb[0].mxu0
      %v365 = vadd.f32 %v228, %v364
      %366 = vmatprep.mubr.f32.mxu0 0.0
      %367 = vmatmul.mubr.f32.gmra.mrb[0].mxu0 %v258
      %v368 = vpop.f32.mrb[0].mxu0
      %v369 = vadd.f32 %v233, %v368
      %v370 = vpop.f32.mrb[0].mxu0
      %v371 = vadd.f32 %v233, %v370
      %372 = vdwg.mxu0
      %373 = vxpose.xlu0.b32.start [1/16] %v171, 128
      %374 = vxpose.xlu0.b32.cont [2/16] %v173, 128
      %375 = vxpose.xlu0.b32.cont [3/16] %v175, 128
      %376 = vxpose.xlu0.b32.cont [4/16] %v177, 128
      %377 = vxpose.xlu0.b32.cont [5/16] 0.0, 128
      %378 = vxpose.xlu0.b32.cont [6/16] 0.0, 128
      %379 = vxpose.xlu0.b32.cont [7/16] 0.0, 128
      %380 = vxpose.xlu0.b32.cont [8/16] 0.0, 128
      %381 = vxpose.xlu0.b32.cont [9/16] 0.0, 128
      %382 = vxpose.xlu0.b32.cont [10/16] 0.0, 128
      %383 = vxpose.xlu0.b32.cont [11/16] 0.0, 128
      %384 = vxpose.xlu0.b32.cont [12/16] 0.0, 128
      %385 = vxpose.xlu0.b32.cont [13/16] 0.0, 128
      %386 = vxpose.xlu0.b32.cont [14/16] 0.0, 128
      %387 = vxpose.xlu0.b32.cont [15/16] 0.0, 128
      %388 = vxpose.xlu0.b32.end [16/16] 0.0, 128
      %v389 = vpop.trf.xlu0
      %v390 = vpop.trf.xlu0
      %v391 = vpop.trf.xlu0
      %v392 = vpop.trf.xlu0
      %v393 = vpop.trf.xlu0
      %v394 = vpop.trf.xlu0
      %v395 = vpop.trf.xlu0
      %v396 = vpop.trf.xlu0
      %v397 = vpop.trf.xlu0
      %v398 = vpop.trf.xlu0
      %v399 = vpop.trf.xlu0
      %v400 = vpop.trf.xlu0
      %v401 = vpop.trf.xlu0
      %v402 = vpop.trf.xlu0
      %v403 = vpop.trf.xlu0
      %v404 = vpop.trf.xlu0
      %405 = vxpose.xlu0.b32.start [1/16] %v172, 128
      %406 = vxpose.xlu0.b32.cont [2/16] %v174, 128
      %407 = vxpose.xlu0.b32.cont [3/16] %v176, 128
      %408 = vxpose.xlu0.b32.cont [4/16] %v178, 128
      %409 = vxpose.xlu0.b32.cont [5/16] 0.0, 128
      %410 = vxpose.xlu0.b32.cont [6/16] 0.0, 128
      %411 = vxpose.xlu0.b32.cont [7/16] 0.0, 128
      %412 = vxpose.xlu0.b32.cont [8/16] 0.0, 128
      %413 = vxpose.xlu0.b32.cont [9/16] 0.0, 128
      %414 = vxpose.xlu0.b32.cont [10/16] 0.0, 128
      %415 = vxpose.xlu0.b32.cont [11/16] 0.0, 128
      %416 = vxpose.xlu0.b32.cont [12/16] 0.0, 128
      %417 = vxpose.xlu0.b32.cont [13/16] 0.0, 128
      %418 = vxpose.xlu0.b32.cont [14/16] 0.0, 128
      %419 = vxpose.xlu0.b32.cont [15/16] 0.0, 128
      %420 = vxpose.xlu0.b32.end [16/16] 0.0, 128
      %v421 = vpop.trf.xlu0
      %v422 = vpop.trf.xlu0
      %v423 = vpop.trf.xlu0
      %v424 = vpop.trf.xlu0
      %v425 = vpop.trf.xlu0
      %v426 = vpop.trf.xlu0
      %v427 = vpop.trf.xlu0
      %v428 = vpop.trf.xlu0
      %v429 = vpop.trf.xlu0
      %v430 = vpop.trf.xlu0
      %v431 = vpop.trf.xlu0
      %v432 = vpop.trf.xlu0
      %v433 = vpop.trf.xlu0
      %v434 = vpop.trf.xlu0
      %v435 = vpop.trf.xlu0
      %v436 = vpop.trf.xlu0
      %v438 = vsel %vm235, %v389, 0
      %v441 = vsel %vm235, %v390, 0
      %v444 = vsel %vm235, %v391, 0
      %v447 = vsel %vm235, %v392, 0
      %v450 = vsel %vm235, %v393, 0
      %v453 = vsel %vm235, %v394, 0
      %v456 = vsel %vm235, %v395, 0
      %v459 = vsel %vm235, %v396, 0
      %v462 = vsel %vm235, %v397, 0
      %v465 = vsel %vm235, %v398, 0
      %v468 = vsel %vm235, %v399, 0
      %v471 = vsel %vm235, %v400, 0
      %v474 = vsel %vm235, %v401, 0
      %v477 = vsel %vm235, %v402, 0
      %v480 = vsel %vm235, %v403, 0
      %v483 = vsel %vm235, %v404, 0
      %v486 = vsel %vm235, %v421, 0
      %v489 = vsel %vm235, %v422, 0
      %v492 = vsel %vm235, %v423, 0
      %v495 = vsel %vm235, %v424, 0
      %v498 = vsel %vm235, %v425, 0
      %v501 = vsel %vm235, %v426, 0
      %v504 = vsel %vm235, %v427, 0
      %v507 = vsel %vm235, %v428, 0
      %v510 = vsel %vm235, %v429, 0
      %v513 = vsel %vm235, %v430, 0
      %v516 = vsel %vm235, %v431, 0
      %v519 = vsel %vm235, %v432, 0
      %v522 = vsel %vm235, %v433, 0
      %v525 = vsel %vm235, %v434, 0
      %v528 = vsel %vm235, %v435, 0
      %v531 = vsel %vm235, %v436, 0
      %533 = vmatprep.subr.mxu0 %v329
      %534 = vmatpush1.msra.mxu0 %v327
      %535 = vmatprep.subr.mxu0 %v335
      %536 = vmatpush1.msra.mxu0 %v333
      %537 = vmatprep.subr.mxu0 %v341
      %538 = vmatpush1.msra.mxu0 %v339
      %539 = vmatprep.subr.mxu0 %v347
      %540 = vmatpush1.msra.mxu0 %v345
      %541 = vmatprep.subr.mxu0 0.0
      %542 = vmatpush1.msra.mxu0 0.0
      %543 = vmatprep.subr.mxu0 0.0
      %544 = vmatpush1.msra.mxu0 0.0
      %545 = vmatprep.subr.mxu0 0.0
      %546 = vmatpush1.msra.mxu0 0.0
      %547 = vmatprep.subr.mxu0 0.0
      %548 = vmatpush1.msra.mxu0 0.0
      %549 = vmatprep.subr.mxu0 0.0
      %550 = vmatpush1.msra.mxu0 0.0
      %551 = vmatprep.subr.mxu0 0.0
      %552 = vmatpush1.msra.mxu0 0.0
      %553 = vmatprep.subr.mxu0 0.0
      %554 = vmatpush1.msra.mxu0 0.0
      %555 = vmatprep.subr.mxu0 0.0
      %556 = vmatpush1.msra.mxu0 0.0
      %557 = vmatprep.subr.mxu0 0.0
      %558 = vmatpush1.msra.mxu0 0.0
      %559 = vmatprep.subr.mxu0 0.0
      %560 = vmatpush1.msra.mxu0 0.0
      %561 = vmatprep.subr.mxu0 0.0
      %562 = vmatpush1.msra.mxu0 0.0
      %563 = vmatprep.subr.mxu0 0.0
      %564 = vmatpush1.msra.mxu0 0.0
      %565 = vmatprep.subr.mxu0 0.0
      %566 = vmatpush1.msra.mxu0 0.0
      %567 = vmatprep.subr.mxu0 0.0
      %568 = vmatpush1.msra.mxu0 0.0
      %569 = vmatprep.subr.mxu0 0.0
      %570 = vmatpush1.msra.mxu0 0.0
      %571 = vmatprep.subr.mxu0 0.0
      %572 = vmatpush1.msra.mxu0 0.0
      %573 = vmatprep.subr.mxu0 0.0
      %574 = vmatpush1.msra.mxu0 0.0
      %575 = vmatprep.subr.mxu0 0.0
      %576 = vmatpush1.msra.mxu0 0.0
      %577 = vmatprep.subr.mxu0 0.0
      %578 = vmatpush1.msra.mxu0 0.0
      %579 = vmatprep.subr.mxu0 0.0
      %580 = vmatpush1.msra.mxu0 0.0
      %581 = vmatprep.subr.mxu0 0.0
      %582 = vmatpush1.msra.mxu0 0.0
      %583 = vmatprep.subr.mxu0 0.0
      %584 = vmatpush1.msra.mxu0 0.0
      %585 = vmatprep.subr.mxu0 0.0
      %586 = vmatpush1.msra.mxu0 0.0
      %587 = vmatprep.subr.mxu0 0.0
      %588 = vmatpush1.msra.mxu0 0.0
      %589 = vmatprep.subr.mxu0 0.0
      %590 = vmatpush1.msra.mxu0 0.0
      %591 = vmatprep.subr.mxu0 0.0
      %592 = vmatpush1.msra.mxu0 0.0
      %593 = vmatprep.subr.mxu0 0.0
      %594 = vmatpush1.msra.mxu0 0.0
      %595 = vmatprep.subr.mxu0 0.0
      %596 = vmatpush1.msra.mxu0 0.0
      %597 = vmatprep.mubr.f32.mxu0 0.0
      %598 = vmatmul.mubr.f32.gmra.mrb[0].mxu0 %v438
      %v599 = vpop.f32.mrb[0].mxu0
      %v600 = vadd.f32 0.0, %v599
      %v601 = vpop.f32.mrb[0].mxu0
      %v602 = vadd.f32 0.0, %v601
      %603 = vmatprep.mubr.f32.mxu0 0.0
      %604 = vmatmul.mubr.f32.gmra.mrb[0].mxu0 %v441
      %v605 = vpop.f32.mrb[0].mxu0
      %v606 = vadd.f32 0.0, %v605
      %v607 = vpop.f32.mrb[0].mxu0
      %v608 = vadd.f32 0.0, %v607
      %609 = vmatprep.mubr.f32.mxu0 0.0
      %610 = vmatmul.mubr.f32.gmra.mrb[0].mxu0 %v444
      %v611 = vpop.f32.mrb[0].mxu0
      %v612 = vadd.f32 0.0, %v611
      %v613 = vpop.f32.mrb[0].mxu0
      %v614 = vadd.f32 0.0, %v613
      %615 = vmatprep.mubr.f32.mxu0 0.0
      %616 = vmatmul.mubr.f32.gmra.mrb[0].mxu0 %v447
      %v617 = vpop.f32.mrb[0].mxu0
      %v618 = vadd.f32 0.0, %v617
      %v619 = vpop.f32.mrb[0].mxu0
      %v620 = vadd.f32 0.0, %v619
      %621 = vmatprep.mubr.f32.mxu0 0.0
      %622 = vmatmul.mubr.f32.gmra.mrb[0].mxu0 %v450
      %v623 = vpop.f32.mrb[0].mxu0
      %v624 = vadd.f32 0.0, %v623
      %v625 = vpop.f32.mrb[0].mxu0
      %v626 = vadd.f32 0.0, %v625
      %627 = vmatprep.mubr.f32.mxu0 0.0
      %628 = vmatmul.mubr.f32.gmra.mrb[0].mxu0 %v453
      %v629 = vpop.f32.mrb[0].mxu0
      %v630 = vadd.f32 0.0, %v629
      %v631 = vpop.f32.mrb[0].mxu0
      %v632 = vadd.f32 0.0, %v631
      %633 = vmatprep.mubr.f32.mxu0 0.0
      %634 = vmatmul.mubr.f32.gmra.mrb[0].mxu0 %v456
      %v635 = vpop.f32.mrb[0].mxu0
      %v636 = vadd.f32 0.0, %v635
      %v637 = vpop.f32.mrb[0].mxu0
      %v638 = vadd.f32 0.0, %v637
      %639 = vmatprep.mubr.f32.mxu0 0.0
      %640 = vmatmul.mubr.f32.gmra.mrb[0].mxu0 %v459
      %v641 = vpop.f32.mrb[0].mxu0
      %v642 = vadd.f32 0.0, %v641
      %v643 = vpop.f32.mrb[0].mxu0
      %v644 = vadd.f32 0.0, %v643
      %645 = vmatprep.mubr.f32.mxu0 0.0
      %646 = vmatmul.mubr.f32.gmra.mrb[0].mxu0 %v462
      %v647 = vpop.f32.mrb[0].mxu0
      %v648 = vadd.f32 0.0, %v647
      %v649 = vpop.f32.mrb[0].mxu0
      %v650 = vadd.f32 0.0, %v649
      %651 = vmatprep.mubr.f32.mxu0 0.0
      %652 = vmatmul.mubr.f32.gmra.mrb[0].mxu0 %v465
      %v653 = vpop.f32.mrb[0].mxu0
      %v654 = vadd.f32 0.0, %v653
      %v655 = vpop.f32.mrb[0].mxu0
      %v656 = vadd.f32 0.0, %v655
      %657 = vmatprep.mubr.f32.mxu0 0.0
      %658 = vmatmul.mubr.f32.gmra.mrb[0].mxu0 %v468
      %v659 = vpop.f32.mrb[0].mxu0
      %v660 = vadd.f32 0.0, %v659
      %v661 = vpop.f32.mrb[0].mxu0
      %v662 = vadd.f32 0.0, %v661
      %663 = vmatprep.mubr.f32.mxu0 0.0
      %664 = vmatmul.mubr.f32.gmra.mrb[0].mxu0 %v471
      %v665 = vpop.f32.mrb[0].mxu0
      %v666 = vadd.f32 0.0, %v665
      %v667 = vpop.f32.mrb[0].mxu0
      %v668 = vadd.f32 0.0, %v667
      %669 = vmatprep.mubr.f32.mxu0 0.0
      %670 = vmatmul.mubr.f32.gmra.mrb[0].mxu0 %v474
      %v671 = vpop.f32.mrb[0].mxu0
      %v672 = vadd.f32 0.0, %v671
      %v673 = vpop.f32.mrb[0].mxu0
      %v674 = vadd.f32 0.0, %v673
      %675 = vmatprep.mubr.f32.mxu0 0.0
      %676 = vmatmul.mubr.f32.gmra.mrb[0].mxu0 %v477
      %v677 = vpop.f32.mrb[0].mxu0
      %v678 = vadd.f32 0.0, %v677
      %v679 = vpop.f32.mrb[0].mxu0
      %v680 = vadd.f32 0.0, %v679
      %681 = vmatprep.mubr.f32.mxu0 0.0
      %682 = vmatmul.mubr.f32.gmra.mrb[0].mxu0 %v480
      %v683 = vpop.f32.mrb[0].mxu0
      %v684 = vadd.f32 0.0, %v683
      %v685 = vpop.f32.mrb[0].mxu0
      %v686 = vadd.f32 0.0, %v685
      %687 = vmatprep.mubr.f32.mxu0 0.0
      %688 = vmatmul.mubr.f32.gmra.mrb[0].mxu0 %v483
      %v689 = vpop.f32.mrb[0].mxu0
      %v690 = vadd.f32 0.0, %v689
      %v691 = vpop.f32.mrb[0].mxu0
      %v692 = vadd.f32 0.0, %v691
      %693 = vmatprep.mubr.f32.mxu0 0.0
      %694 = vmatmul.mubr.f32.gmra.mrb[0].mxu0 %v486
      %v695 = vpop.f32.mrb[0].mxu0
      %v696 = vadd.f32 0.0, %v695
      %v697 = vpop.f32.mrb[0].mxu0
      %v698 = vadd.f32 0.0, %v697
      %699 = vmatprep.mubr.f32.mxu0 0.0
      %700 = vmatmul.mubr.f32.gmra.mrb[0].mxu0 %v489
      %v701 = vpop.f32.mrb[0].mxu0
      %v702 = vadd.f32 0.0, %v701
      %v703 = vpop.f32.mrb[0].mxu0
      %v704 = vadd.f32 0.0, %v703
      %705 = vmatprep.mubr.f32.mxu0 0.0
      %706 = vmatmul.mubr.f32.gmra.mrb[0].mxu0 %v492
      %v707 = vpop.f32.mrb[0].mxu0
      %v708 = vadd.f32 0.0, %v707
      %v709 = vpop.f32.mrb[0].mxu0
      %v710 = vadd.f32 0.0, %v709
      %711 = vmatprep.mubr.f32.mxu0 0.0
      %712 = vmatmul.mubr.f32.gmra.mrb[0].mxu0 %v495
      %v713 = vpop.f32.mrb[0].mxu0
      %v714 = vadd.f32 0.0, %v713
      %v715 = vpop.f32.mrb[0].mxu0
      %v716 = vadd.f32 0.0, %v715
      %717 = vmatprep.mubr.f32.mxu0 0.0
      %718 = vmatmul.mubr.f32.gmra.mrb[0].mxu0 %v498
      %v719 = vpop.f32.mrb[0].mxu0
      %v720 = vadd.f32 0.0, %v719
      %v721 = vpop.f32.mrb[0].mxu0
      %v722 = vadd.f32 0.0, %v721
      %723 = vmatprep.mubr.f32.mxu0 0.0
      %724 = vmatmul.mubr.f32.gmra.mrb[0].mxu0 %v501
      %v725 = vpop.f32.mrb[0].mxu0
      %v726 = vadd.f32 0.0, %v725
      %v727 = vpop.f32.mrb[0].mxu0
      %v728 = vadd.f32 0.0, %v727
      %729 = vmatprep.mubr.f32.mxu0 0.0
      %730 = vmatmul.mubr.f32.gmra.mrb[0].mxu0 %v504
      %v731 = vpop.f32.mrb[0].mxu0
      %v732 = vadd.f32 0.0, %v731
      %v733 = vpop.f32.mrb[0].mxu0
      %v734 = vadd.f32 0.0, %v733
      %735 = vmatprep.mubr.f32.mxu0 0.0
      %736 = vmatmul.mubr.f32.gmra.mrb[0].mxu0 %v507
      %v737 = vpop.f32.mrb[0].mxu0
      %v738 = vadd.f32 0.0, %v737
      %v739 = vpop.f32.mrb[0].mxu0
      %v740 = vadd.f32 0.0, %v739
      %741 = vmatprep.mubr.f32.mxu0 0.0
      %742 = vmatmul.mubr.f32.gmra.mrb[0].mxu0 %v510
      %v743 = vpop.f32.mrb[0].mxu0
      %v744 = vadd.f32 0.0, %v743
      %v745 = vpop.f32.mrb[0].mxu0
      %v746 = vadd.f32 0.0, %v745
      %747 = vmatprep.mubr.f32.mxu0 0.0
      %748 = vmatmul.mubr.f32.gmra.mrb[0].mxu0 %v513
      %v749 = vpop.f32.mrb[0].mxu0
      %v750 = vadd.f32 0.0, %v749
      %v751 = vpop.f32.mrb[0].mxu0
      %v752 = vadd.f32 0.0, %v751
      %753 = vmatprep.mubr.f32.mxu0 0.0
      %754 = vmatmul.mubr.f32.gmra.mrb[0].mxu0 %v516
      %v755 = vpop.f32.mrb[0].mxu0
      %v756 = vadd.f32 0.0, %v755
      %v757 = vpop.f32.mrb[0].mxu0
      %v758 = vadd.f32 0.0, %v757
      %759 = vmatprep.mubr.f32.mxu0 0.0
      %760 = vmatmul.mubr.f32.gmra.mrb[0].mxu0 %v519
      %v761 = vpop.f32.mrb[0].mxu0
      %v762 = vadd.f32 0.0, %v761
      %v763 = vpop.f32.mrb[0].mxu0
      %v764 = vadd.f32 0.0, %v763
      %765 = vmatprep.mubr.f32.mxu0 0.0
      %766 = vmatmul.mubr.f32.gmra.mrb[0].mxu0 %v522
      %v767 = vpop.f32.mrb[0].mxu0
      %v768 = vadd.f32 0.0, %v767
      %v769 = vpop.f32.mrb[0].mxu0
      %v770 = vadd.f32 0.0, %v769
      %771 = vmatprep.mubr.f32.mxu0 0.0
      %772 = vmatmul.mubr.f32.gmra.mrb[0].mxu0 %v525
      %v773 = vpop.f32.mrb[0].mxu0
      %v774 = vadd.f32 0.0, %v773
      %v775 = vpop.f32.mrb[0].mxu0
      %v776 = vadd.f32 0.0, %v775
      %777 = vmatprep.mubr.f32.mxu0 0.0
      %778 = vmatmul.mubr.f32.gmra.mrb[0].mxu0 %v528
      %v779 = vpop.f32.mrb[0].mxu0
      %v780 = vadd.f32 0.0, %v779
      %v781 = vpop.f32.mrb[0].mxu0
      %v782 = vadd.f32 0.0, %v781
      %783 = vmatprep.mubr.f32.mxu0 0.0
      %784 = vmatmul.mubr.f32.gmra.mrb[0].mxu0 %v531
      %v785 = vpop.f32.mrb[0].mxu0
      %v786 = vadd.f32 0.0, %v785
      %v787 = vpop.f32.mrb[0].mxu0
      %v788 = vadd.f32 0.0, %v787
      %789 = vdwg.mxu0
      %v790 = vmax.f32 %v600, %v612
      %v791 = vmax.f32 %v606, %v618
      %v792 = vmax.f32 %v790, %v624
      %v793 = vmax.f32 %v791, %v630
      %v794 = vmax.f32 %v792, %v636
      %v795 = vmax.f32 %v793, %v642
      %v796 = vmax.f32 %v794, %v648
      %v797 = vmax.f32 %v795, %v654
      %v798 = vmax.f32 %v796, %v660
      %v799 = vmax.f32 %v797, %v666
      %v800 = vmax.f32 %v798, %v672
      %v801 = vmax.f32 %v799, %v678
      %v802 = vmax.f32 %v800, %v684
      %v803 = vmax.f32 %v801, %v690
      %v804 = vmax.f32 %v802, %v696
      %v805 = vmax.f32 %v803, %v702
      %v806 = vmax.f32 %v804, %v708
      %v807 = vmax.f32 %v805, %v714
      %v808 = vmax.f32 %v806, %v720
      %v809 = vmax.f32 %v807, %v726
      %v810 = vmax.f32 %v808, %v732
      %v811 = vmax.f32 %v809, %v738
      %v812 = vmax.f32 %v810, %v744
      %v813 = vmax.f32 %v811, %v750
      %v814 = vmax.f32 %v812, %v756
      %v815 = vmax.f32 %v813, %v762
      %v816 = vmax.f32 %v814, %v768
      %v817 = vmax.f32 %v815, %v774
      %v818 = vmax.f32 %v816, %v780
      %v819 = vmax.f32 %v817, %v786
      %v820 = vmax.f32 %v818, %v819
      %v821 = vrot.slane %v820, 4
      %v822 = vmax.f32 %v820, %v821
      %v823 = vrot.slane %v822, 2
      %v824 = vmax.f32 %v822, %v823
      %v825 = vrot.slane %v824, 1
      %v826 = vmax.f32 %v824, %v825
      %v827 = vmax.f32 %v602, %v614
      %v828 = vmax.f32 %v608, %v620
      %v829 = vmax.f32 %v827, %v626
      %v830 = vmax.f32 %v828, %v632
      %v831 = vmax.f32 %v829, %v638
      %v832 = vmax.f32 %v830, %v644
      %v833 = vmax.f32 %v831, %v650
      %v834 = vmax.f32 %v832, %v656
      %v835 = vmax.f32 %v833, %v662
      %v836 = vmax.f32 %v834, %v668
      %v837 = vmax.f32 %v835, %v674
      %v838 = vmax.f32 %v836, %v680
      %v839 = vmax.f32 %v837, %v686
      %v840 = vmax.f32 %v838, %v692
      %v841 = vmax.f32 %v839, %v698
      %v842 = vmax.f32 %v840, %v704
      %v843 = vmax.f32 %v841, %v710
      %v844 = vmax.f32 %v842, %v716
      %v845 = vmax.f32 %v843, %v722
      %v846 = vmax.f32 %v844, %v728
      %v847 = vmax.f32 %v845, %v734
      %v848 = vmax.f32 %v846, %v740
      %v849 = vmax.f32 %v847, %v746
      %v850 = vmax.f32 %v848, %v752
      %v851 = vmax.f32 %v849, %v758
      %v852 = vmax.f32 %v850, %v764
      %v853 = vmax.f32 %v851, %v770
      %v854 = vmax.f32 %v852, %v776
      %v855 = vmax.f32 %v853, %v782
      %v856 = vmax.f32 %v854, %v788
      %v857 = vmax.f32 %v855, %v856
      %v858 = vrot.slane %v857, 4
      %v859 = vmax.f32 %v857, %v858
      %v860 = vrot.slane %v859, 2
      %v861 = vmax.f32 %v859, %v860
      %v862 = vrot.slane %v861, 1
      %v863 = vmax.f32 %v861, %v862
      %v864 = vsub.f32 %v600, %v826
      %v865 = vsub.f32 %v602, %v863
      %v866 = vsub.f32 %v606, %v826
      %v867 = vsub.f32 %v608, %v863
      %v868 = vsub.f32 %v612, %v826
      %v869 = vsub.f32 %v614, %v863
      %v870 = vsub.f32 %v618, %v826
      %v871 = vsub.f32 %v620, %v863
      %v872 = vsub.f32 %v624, %v826
      %v873 = vsub.f32 %v626, %v863
      %v874 = vsub.f32 %v630, %v826
      %v875 = vsub.f32 %v632, %v863
      %v876 = vsub.f32 %v636, %v826
      %v877 = vsub.f32 %v638, %v863
      %v878 = vsub.f32 %v642, %v826
      %v879 = vsub.f32 %v644, %v863
      %v880 = vsub.f32 %v648, %v826
      %v881 = vsub.f32 %v650, %v863
      %v882 = vsub.f32 %v654, %v826
      %v883 = vsub.f32 %v656, %v863
      %v884 = vsub.f32 %v660, %v826
      %v885 = vsub.f32 %v662, %v863
      %v886 = vsub.f32 %v666, %v826
      %v887 = vsub.f32 %v668, %v863
      %v888 = vsub.f32 %v672, %v826
      %v889 = vsub.f32 %v674, %v863
      %v890 = vsub.f32 %v678, %v826
      %v891 = vsub.f32 %v680, %v863
      %v892 = vsub.f32 %v684, %v826
      %v893 = vsub.f32 %v686, %v863
      %v894 = vsub.f32 %v690, %v826
      %v895 = vsub.f32 %v692, %v863
      %v896 = vsub.f32 %v696, %v826
      %v897 = vsub.f32 %v698, %v863
      %v898 = vsub.f32 %v702, %v826
      %v899 = vsub.f32 %v704, %v863
      %v900 = vsub.f32 %v708, %v826
      %v901 = vsub.f32 %v710, %v863
      %v902 = vsub.f32 %v714, %v826
      %v903 = vsub.f32 %v716, %v863
      %v904 = vsub.f32 %v720, %v826
      %v905 = vsub.f32 %v722, %v863
      %v906 = vsub.f32 %v726, %v826
      %v907 = vsub.f32 %v728, %v863
      %v908 = vsub.f32 %v732, %v826
      %v909 = vsub.f32 %v734, %v863
      %v910 = vsub.f32 %v738, %v826
      %v911 = vsub.f32 %v740, %v863
      %v912 = vsub.f32 %v744, %v826
      %v913 = vsub.f32 %v746, %v863
      %v914 = vsub.f32 %v750, %v826
      %v915 = vsub.f32 %v752, %v863
      %v916 = vsub.f32 %v756, %v826
      %v917 = vsub.f32 %v758, %v863
      %v918 = vsub.f32 %v762, %v826
      %v919 = vsub.f32 %v764, %v863
      %v920 = vsub.f32 %v768, %v826
      %v921 = vsub.f32 %v770, %v863
      %v922 = vsub.f32 %v774, %v826
      %v923 = vsub.f32 %v776, %v863
      %v924 = vsub.f32 %v780, %v826
      %v925 = vsub.f32 %v782, %v863
      %v926 = vsub.f32 %v786, %v826
      %v927 = vsub.f32 %v788, %v863
      %v928 = vmul.f32 %v864, 1.442695
      %v929 = vpow.pop %v928
      %v930 = vmul.f32 %v865, 1.442695
      %v931 = vpow.pop %v930
      %v932 = vmul.f32 %v866, 1.442695
      %v933 = vpow.pop %v932
      %v934 = vmul.f32 %v867, 1.442695
      %v935 = vpow.pop %v934
      %v936 = vmul.f32 %v868, 1.442695
      %v937 = vpow.pop %v936
      %v938 = vmul.f32 %v869, 1.442695
      %v939 = vpow.pop %v938
      %v940 = vmul.f32 %v870, 1.442695
      %v941 = vpow.pop %v940
      %v942 = vmul.f32 %v871, 1.442695
      %v943 = vpow.pop %v942
      %v944 = vmul.f32 %v872, 1.442695
      %v945 = vpow.pop %v944
      %v946 = vmul.f32 %v873, 1.442695
      %v947 = vpow.pop %v946
      %v948 = vmul.f32 %v874, 1.442695
      %v949 = vpow.pop %v948
      %v950 = vmul.f32 %v875, 1.442695
      %v951 = vpow.pop %v950
      %v952 = vmul.f32 %v876, 1.442695
      %v953 = vpow.pop %v952
      %v954 = vmul.f32 %v877, 1.442695
      %v955 = vpow.pop %v954
      %v956 = vmul.f32 %v878, 1.442695
      %v957 = vpow.pop %v956
      %v958 = vmul.f32 %v879, 1.442695
      %v959 = vpow.pop %v958
      %v960 = vmul.f32 %v880, 1.442695
      %v961 = vpow.pop %v960
      %v962 = vmul.f32 %v881, 1.442695
      %v963 = vpow.pop %v962
      %v964 = vmul.f32 %v882, 1.442695
      %v965 = vpow.pop %v964
      %v966 = vmul.f32 %v883, 1.442695
      %v967 = vpow.pop %v966
      %v968 = vmul.f32 %v884, 1.442695
      %v969 = vpow.pop %v968
      %v970 = vmul.f32 %v885, 1.442695
      %v971 = vpow.pop %v970
      %v972 = vmul.f32 %v886, 1.442695
      %v973 = vpow.pop %v972
      %v974 = vmul.f32 %v887, 1.442695
      %v975 = vpow.pop %v974
      %v976 = vmul.f32 %v888, 1.442695
      %v977 = vpow.pop %v976
      %v978 = vmul.f32 %v889, 1.442695
      %v979 = vpow.pop %v978
      %v980 = vmul.f32 %v890, 1.442695
      %v981 = vpow.pop %v980
      %v982 = vmul.f32 %v891, 1.442695
      %v983 = vpow.pop %v982
      %v984 = vmul.f32 %v892, 1.442695
      %v985 = vpow.pop %v984
      %v986 = vmul.f32 %v893, 1.442695
      %v987 = vpow.pop %v986
      %v988 = vmul.f32 %v894, 1.442695
      %v989 = vpow.pop %v988
      %v990 = vmul.f32 %v895, 1.442695
      %v991 = vpow.pop %v990
      %v992 = vmul.f32 %v896, 1.442695
      %v993 = vpow.pop %v992
      %v994 = vmul.f32 %v897, 1.442695
      %v995 = vpow.pop %v994
      %v996 = vmul.f32 %v898, 1.442695
      %v997 = vpow.pop %v996
      %v998 = vmul.f32 %v899, 1.442695
      %v999 = vpow.pop %v998
      %v1000 = vmul.f32 %v900, 1.442695
      %v1001 = vpow.pop %v1000
      %v1002 = vmul.f32 %v901, 1.442695
      %v1003 = vpow.pop %v1002
      %v1004 = vmul.f32 %v902, 1.442695
      %v1005 = vpow.pop %v1004
      %v1006 = vmul.f32 %v903, 1.442695
      %v1007 = vpow.pop %v1006
      %v1008 = vmul.f32 %v904, 1.442695
      %v1009 = vpow.pop %v1008
      %v1010 = vmul.f32 %v905, 1.442695
      %v1011 = vpow.pop %v1010
      %v1012 = vmul.f32 %v906, 1.442695
      %v1013 = vpow.pop %v1012
      %v1014 = vmul.f32 %v907, 1.442695
      %v1015 = vpow.pop %v1014
      %v1016 = vmul.f32 %v908, 1.442695
      %v1017 = vpow.pop %v1016
      %v1018 = vmul.f32 %v909, 1.442695
      %v1019 = vpow.pop %v1018
      %v1020 = vmul.f32 %v910, 1.442695
      %v1021 = vpow.pop %v1020
      %v1022 = vmul.f32 %v911, 1.442695
      %v1023 = vpow.pop %v1022
      %v1024 = vmul.f32 %v912, 1.442695
      %v1025 = vpow.pop %v1024
      %v1026 = vmul.f32 %v913, 1.442695
      %v1027 = vpow.pop %v1026
      %v1028 = vmul.f32 %v914, 1.442695
      %v1029 = vpow.pop %v1028
      %v1030 = vmul.f32 %v915, 1.442695
      %v1031 = vpow.pop %v1030
      %v1032 = vmul.f32 %v916, 1.442695
      %v1033 = vpow.pop %v1032
      %v1034 = vmul.f32 %v917, 1.442695
      %v1035 = vpow.pop %v1034
      %v1036 = vmul.f32 %v918, 1.442695
      %v1037 = vpow.pop %v1036
      %v1038 = vmul.f32 %v919, 1.442695
      %v1039 = vpow.pop %v1038
      %v1040 = vmul.f32 %v920, 1.442695
      %v1041 = vpow.pop %v1040
      %v1042 = vmul.f32 %v921, 1.442695
      %v1043 = vpow.pop %v1042
      %v1044 = vmul.f32 %v922, 1.442695
      %v1045 = vpow.pop %v1044
      %v1046 = vmul.f32 %v923, 1.442695
      %v1047 = vpow.pop %v1046
      %v1048 = vmul.f32 %v924, 1.442695
      %v1049 = vpow.pop %v1048
      %v1050 = vmul.f32 %v925, 1.442695
      %v1051 = vpow.pop %v1050
      %v1052 = vmul.f32 %v926, 1.442695
      %v1053 = vpow.pop %v1052
      %v1054 = vmul.f32 %v927, 1.442695
      %v1055 = vpow.pop %v1054
      %v1056 = vadd.f32 %v929, %v933
      %v1057 = vadd.f32 %v1056, %v937
      %v1058 = vadd.f32 %v1057, %v941
      %v1059 = vadd.f32 %v1058, %v945
      %v1060 = vadd.f32 %v1059, %v949
      %v1061 = vadd.f32 %v1060, %v953
      %v1062 = vadd.f32 %v1061, %v957
      %v1063 = vadd.f32 %v1062, %v961
      %v1064 = vadd.f32 %v1063, %v965
      %v1065 = vadd.f32 %v1064, %v969
      %v1066 = vadd.f32 %v1065, %v973
      %v1067 = vadd.f32 %v1066, %v977
      %v1068 = vadd.f32 %v1067, %v981
      %v1069 = vadd.f32 %v1068, %v985
      %v1070 = vadd.f32 %v1069, %v989
      %v1071 = vadd.f32 %v1070, %v993
      %v1072 = vadd.f32 %v1071, %v997
      %v1073 = vadd.f32 %v1072, %v1001
      %v1074 = vadd.f32 %v1073, %v1005
      %v1075 = vadd.f32 %v1074, %v1009
      %v1076 = vadd.f32 %v1075, %v1013
      %v1077 = vadd.f32 %v1076, %v1017
      %v1078 = vadd.f32 %v1077, %v1021
      %v1079 = vadd.f32 %v1078, %v1025
      %v1080 = vadd.f32 %v1079, %v1029
      %v1081 = vadd.f32 %v1080, %v1033
      %v1082 = vadd.f32 %v1081, %v1037
      %v1083 = vadd.f32 %v1082, %v1041
      %v1084 = vadd.f32 %v1083, %v1045
      %v1085 = vadd.f32 %v1084, %v1049
      %v1086 = vadd.f32 %v1085, %v1053
      %v1087 = vrot.slane %v1086, 4
      %v1088 = vadd.f32 %v1086, %v1087
      %v1089 = vrot.slane %v1088, 2
      %v1090 = vadd.f32 %v1088, %v1089
      %v1091 = vrot.slane %v1090, 1
      %v1092 = vadd.f32 %v1090, %v1091
      %v1093 = vadd.f32 %v931, %v935
      %v1094 = vadd.f32 %v1093, %v939
      %v1095 = vadd.f32 %v1094, %v943
      %v1096 = vadd.f32 %v1095, %v947
      %v1097 = vadd.f32 %v1096, %v951
      %v1098 = vadd.f32 %v1097, %v955
      %v1099 = vadd.f32 %v1098, %v959
      %v1100 = vadd.f32 %v1099, %v963
      %v1101 = vadd.f32 %v1100, %v967
      %v1102 = vadd.f32 %v1101, %v971
      %v1103 = vadd.f32 %v1102, %v975
      %v1104 = vadd.f32 %v1103, %v979
      %v1105 = vadd.f32 %v1104, %v983
      %v1106 = vadd.f32 %v1105, %v987
      %v1107 = vadd.f32 %v1106, %v991
      %v1108 = vadd.f32 %v1107, %v995
      %v1109 = vadd.f32 %v1108, %v999
      %v1110 = vadd.f32 %v1109, %v1003
      %v1111 = vadd.f32 %v1110, %v1007
      %v1112 = vadd.f32 %v1111, %v1011
      %v1113 = vadd.f32 %v1112, %v1015
      %v1114 = vadd.f32 %v1113, %v1019
      %v1115 = vadd.f32 %v1114, %v1023
      %v1116 = vadd.f32 %v1115, %v1027
      %v1117 = vadd.f32 %v1116, %v1031
      %v1118 = vadd.f32 %v1117, %v1035
      %v1119 = vadd.f32 %v1118, %v1039
      %v1120 = vadd.f32 %v1119, %v1043
      %v1121 = vadd.f32 %v1120, %v1047
      %v1122 = vadd.f32 %v1121, %v1051
      %v1123 = vadd.f32 %v1122, %v1055
      %v1124 = vrot.slane %v1123, 4
      %v1125 = vadd.f32 %v1123, %v1124
      %v1126 = vrot.slane %v1125, 2
      %v1127 = vadd.f32 %v1125, %v1126
      %v1128 = vrot.slane %v1127, 1
      %v1129 = vadd.f32 %v1127, %v1128
      %1130 = vmatprep.subr.mxu0 %v931
      %1131 = vmatpush1.msra.mxu0 %v929
      %1132 = vmatprep.subr.mxu0 %v935
      %1133 = vmatpush1.msra.mxu0 %v933
      %1134 = vmatprep.subr.mxu0 %v939
      %1135 = vmatpush1.msra.mxu0 %v937
      %1136 = vmatprep.subr.mxu0 %v943
      %1137 = vmatpush1.msra.mxu0 %v941
      %1138 = vmatprep.subr.mxu0 %v947
      %1139 = vmatpush1.msra.mxu0 %v945
      %1140 = vmatprep.subr.mxu0 %v951
      %1141 = vmatpush1.msra.mxu0 %v949
      %1142 = vmatprep.subr.mxu0 %v955
      %1143 = vmatpush1.msra.mxu0 %v953
      %1144 = vmatprep.subr.mxu0 %v959
      %1145 = vmatpush1.msra.mxu0 %v957
      %1146 = vmatprep.subr.mxu0 %v963
      %1147 = vmatpush1.msra.mxu0 %v961
      %1148 = vmatprep.subr.mxu0 %v967
      %1149 = vmatpush1.msra.mxu0 %v965
      %1150 = vmatprep.subr.mxu0 %v971
      %1151 = vmatpush1.msra.mxu0 %v969
      %1152 = vmatprep.subr.mxu0 %v975
      %1153 = vmatpush1.msra.mxu0 %v973
      %1154 = vmatprep.subr.mxu0 %v979
      %1155 = vmatpush1.msra.mxu0 %v977
      %1156 = vmatprep.subr.mxu0 %v983
      %1157 = vmatpush1.msra.mxu0 %v981
      %1158 = vmatprep.subr.mxu0 %v987
      %1159 = vmatpush1.msra.mxu0 %v985
      %1160 = vmatprep.subr.mxu0 %v991
      %1161 = vmatpush1.msra.mxu0 %v989
      %1162 = vmatprep.subr.mxu0 %v995
      %1163 = vmatpush1.msra.mxu0 %v993
      %1164 = vmatprep.subr.mxu0 %v999
      %1165 = vmatpush1.msra.mxu0 %v997
      %1166 = vmatprep.subr.mxu0 %v1003
      %1167 = vmatpush1.msra.mxu0 %v1001
      %1168 = vmatprep.subr.mxu0 %v1007
      %1169 = vmatpush1.msra.mxu0 %v1005
      %1170 = vmatprep.subr.mxu0 %v1011
      %1171 = vmatpush1.msra.mxu0 %v1009
      %1172 = vmatprep.subr.mxu0 %v1015
      %1173 = vmatpush1.msra.mxu0 %v1013
      %1174 = vmatprep.subr.mxu0 %v1019
      %1175 = vmatpush1.msra.mxu0 %v1017
      %1176 = vmatprep.subr.mxu0 %v1023
      %1177 = vmatpush1.msra.mxu0 %v1021
      %1178 = vmatprep.subr.mxu0 %v1027
      %1179 = vmatpush1.msra.mxu0 %v1025
      %1180 = vmatprep.subr.mxu0 %v1031
      %1181 = vmatpush1.msra.mxu0 %v1029
      %1182 = vmatprep.subr.mxu0 %v1035
      %1183 = vmatpush1.msra.mxu0 %v1033
      %1184 = vmatprep.subr.mxu0 %v1039
      %1185 = vmatpush1.msra.mxu0 %v1037
      %1186 = vmatprep.subr.mxu0 %v1043
      %1187 = vmatpush1.msra.mxu0 %v1041
      %1188 = vmatprep.subr.mxu0 %v1047
      %1189 = vmatpush1.msra.mxu0 %v1045
      %1190 = vmatprep.subr.mxu0 %v1051
      %1191 = vmatpush1.msra.mxu0 %v1049
      %1192 = vmatprep.subr.mxu0 %v1055
      %1193 = vmatpush1.msra.mxu0 %v1053
      %1194 = vmatprep.mubr.f32.mxu0 %v353
      %1195 = vmatmul.mubr.f32.gmra.mrb[0].mxu0 %v351
      %v1196 = vpop.f32.mrb[0].mxu0
      %v1197 = vadd.f32 0.0, %v1196
      %v1198 = vpop.f32.mrb[0].mxu0
      %v1199 = vadd.f32 0.0, %v1198
      %1200 = vmatprep.mubr.f32.mxu0 %v359
      %1201 = vmatmul.mubr.f32.gmra.mrb[0].mxu0 %v357
      %v1202 = vpop.f32.mrb[0].mxu0
      %v1203 = vadd.f32 0.0, %v1202
      %v1204 = vpop.f32.mrb[0].mxu0
      %v1205 = vadd.f32 0.0, %v1204
      %1206 = vmatprep.mubr.f32.mxu0 %v365
      %1207 = vmatmul.mubr.f32.gmra.mrb[0].mxu0 %v363
      %v1208 = vpop.f32.mrb[0].mxu0
      %v1209 = vadd.f32 0.0, %v1208
      %v1210 = vpop.f32.mrb[0].mxu0
      %v1211 = vadd.f32 0.0, %v1210
      %1212 = vmatprep.mubr.f32.mxu0 %v371
      %1213 = vmatmul.mubr.f32.gmra.mrb[0].mxu0 %v369
      %v1214 = vpop.f32.mrb[0].mxu0
      %v1215 = vadd.f32 0.0, %v1214
      %v1216 = vpop.f32.mrb[0].mxu0
      %v1217 = vadd.f32 0.0, %v1216
      %1218 = vdwg.mxu0
      %v1219 = vrcp.pop %v1092
      %v1220 = vmul.f32 1.0, %v1219
      %v1221 = vrcp.pop %v1129
      %v1222 = vmul.f32 1.0, %v1221
      %v1223 = vmul.f32 %v1197, %v1220
      %v1224 = vmul.f32 %v1199, %v1222
      %v1225 = vmul.f32 %v1203, %v1220
      %v1226 = vmul.f32 %v1205, %v1222
      %v1227 = vmul.f32 %v1209, %v1220
      %v1228 = vmul.f32 %v1211, %v1222
      %v1229 = vmul.f32 %v1215, %v1220
      %v1230 = vmul.f32 %v1217, %v1222
      %v1231 = vadd.f32 %v1223, %v171
      %v1232 = vadd.f32 %v1224, %v172
      %v1233 = vadd.f32 %v1225, %v173
      %v1234 = vadd.f32 %v1226, %v174
      %v1235 = vadd.f32 %v1227, %v175
      %v1236 = vadd.f32 %v1228, %v176
      %v1237 = vadd.f32 %v1229, %v177
      %v1238 = vadd.f32 %v1230, %v178
      %1239 = vst [vmem:[%s170] sm:$0xff] %v1231
      %1240 = vst [vmem:[%s170 + $0x8] sm:$0xff] %v1232
      %1241 = vst [vmem:[%s170 + $0x10] sm:$0xff] %v1233
      %1242 = vst [vmem:[%s170 + $0x18] sm:$0xff] %v1234
      %1243 = vst [vmem:[%s170 + $0x20] sm:$0xff] %v1235
      %1244 = vst [vmem:[%s170 + $0x28] sm:$0xff] %v1236
      %1245 = vst [vmem:[%s170 + $0x30] sm:$0xff] %v1237
      %1246 = vst [vmem:[%s170 + $0x38] sm:$0xff] %v1238
      %p1247 = scmp.lt.s32.totalorder %s14, 1
      %s1248 = scalar_select %p1247, %s14, 1
      %s1249 = smul.addr %s1248, 8
      %s1250 = smul.addr %s1249, 8
      %s1251 = scalar_lea.vmem %s3, %s1250
      // Predicated region
      $region33: #{self_attention_pallas.1} parent=31 // pred_check
        %p1252 = pneg %p100
      $region34: #{self_attention_pallas.1} parent=31 // pred_check_branch
        %1254 = sbr.rel (%p1252) target = $region36
      $region35: #{self_attention_pallas.1} parent=31 // pred_region
        _
      $region36: #{self_attention_pallas.1} parent=31 // pred_fallthru
        _
    $region32: #{self_attention_pallas.1} parent=5 // pred_fallthru
      _
    %p1255 = scmp.le.s32.totalorder 2, %s9
    // Predicated region
    $region37: #{self_attention_pallas.1} parent=5 // pred_check
      %p1256 = pneg %p1255
    $region38: #{self_attention_pallas.1} parent=5 // pred_check_branch
      %1258 = sbr.rel (%p1256) target = $region40
    $region39: #{self_attention_pallas.1} parent=5 // pred_region
      %s1259 = ssub.s32 %s9, 2
      // Predicated region
      $region41: #{self_attention_pallas.1} parent=39 // pred_check
        %p1260 = pneg %p106
      $region42: #{self_attention_pallas.1} parent=39 // pred_check_branch
        %1262 = sbr.rel (%p1260) target = $region44
      $region43: #{self_attention_pallas.1} parent=39 // pred_region
        %p1263 = scmp.lt.s32.totalorder %s15, 1
        %s1264 = scalar_select %p1263, %s15, 1
        %s1265 = smul.addr %s1264, 8
        %s1266 = smul.addr %s1265, 8
        %s1267 = scalar_lea.vmem %s3, %s1266
      $region44: #{self_attention_pallas.1} parent=39 // pred_fallthru
        _
    $region40: #{self_attention_pallas.1} parent=5 // pred_fallthru
      _
  $region6: #{self_attention_pallas.1} parent=0 // loop_footer
    %s13 = sadd.s32 1, %s9
  $region7: #{self_attention_pallas.1} parent=0 // loop_footer_branch
    %8 = sbr.rel target = $region3
  $region8: #{self_attention_pallas.1} parent=0 // loop_exit
    _

</llo_original>
